<compile_context>
chip_gen: v6e
topology: v6e:2x2x1
jax: 0.10.0
libtpu: 0.0.40
codegen_flags: <defaults>
</compile_context>

<pallas_src>
import functools
import math

import jax
import jax.numpy as jnp
from jax.experimental import pallas as pl
from jax.experimental.pallas import tpu as pltpu

LOG_STD_MAX = 2.0
LOG_STD_MIN = -20.0
EPS = 1e-6
_HALF_LOG_2PI = 0.5 * math.log(2.0 * math.pi)


def _round_up(x, m):
    return (x + m - 1) // m * m


def _cdiv(a, b):
    return -(-a // b)


def _policy_kernel(x_ref, noise_ref, p_ref, out_ref, *, r1, lw, a_dim):
    """One batch tile of the policy forward pass.

    Packed parameter rows (every offset is a multiple of 8):
      [0,  r1)         w1          (r1 x lw)   real (d_in x h1), zero-padded
      [o1, o1+lw)      w2          (lw x lw)   real (h1 x h2)
      [o2, o2+lw)      w3_mean     (lw x lw)   real cols [0, a_dim)
      [o3, o3+lw)      w3_log_std  (lw x lw)   real cols [0, a_dim)
      [o4, o4+8)       bias block: row0=b1, row1=b2, row2=b3_mean,
                                   row3=b3_log_std, rows 4..7 zero

    Zero padding keeps padded activation lanes identically zero through the
    ReLU trunk, so the only masking is the final offset-0 [:, :a_dim] slices
    (pure lane masks, no cross-lane shuffles).
    """
    o1 = r1
    o2 = o1 + lw
    o3 = o2 + lw
    o4 = o3 + lw

    # Upcast (no-op for f32 inputs; bf16 streaming halves the HBM read, but all
    # elementwise / transcendental math stays f32 -> valid on v5e as well).
    x = x_ref[...].astype(jnp.float32)
    eps = noise_ref[...].astype(jnp.float32)

    w1 = p_ref[0:o1, :]
    w2 = p_ref[o1:o2, :]
    w3m = p_ref[o2:o3, :]
    w3s = p_ref[o3:o4, :]
    bias = p_ref[o4:o4 + 8, :]          # one sublane-aligned 8-row load
    b1 = bias[0:1, :]
    b2 = bias[1:2, :]
    b3m = bias[2:3, :]
    b3s = bias[3:4, :]

    # --- MLP trunk: Linear -> ReLU -> Linear -> ReLU ---
    h = jnp.maximum(jnp.dot(x, w1, preferred_element_type=jnp.float32) + b1, 0.0)
    h = jnp.maximum(jnp.dot(h, w2, preferred_element_type=jnp.float32) + b2, 0.0)

    # --- final layer, mean / log_std heads (kept as two zero-offset halves:
    # every slice stays at lane offset 0; MXU is not the bottleneck here) ---
    mean = (jnp.dot(h, w3m, preferred_element_type=jnp.float32) + b3m)[:, :a_dim]
    log_std = (jnp.dot(h, w3s, preferred_element_type=jnp.float32) + b3s)[:, :a_dim]
    log_std = jnp.clip(log_std, LOG_STD_MIN, LOG_STD_MAX)
    std = jnp.exp(log_std)

    # --- reparameterized sample: x_a = mean + std * eps ---
    x_actions = mean + std * eps
    actions = jnp.tanh(x_actions)

    # Normal(mean, std).log_prob(x_a) with (x_a - mean) = std * eps:
    #   -0.5 * eps^2 - log_std - 0.5 * log(2*pi)
    log_prob = -0.5 * eps * eps - log_std - _HALF_LOG_2PI
    log_probs = log_prob - jnp.log(1.0 - actions * actions + EPS)
    entropies = -jnp.sum(log_probs, axis=1, keepdims=True)

    # Merged output slab [actions | tanh(mean) | entropy]: a single output
    # array / DMA stream per grid step (three static-offset stores into it).
    out_ref[:, 0:a_dim] = actions
    out_ref[:, a_dim:2 * a_dim] = jnp.tanh(mean)
    out_ref[:, 2 * a_dim:2 * a_dim + 1] = entropies


def pack_params(params):
    """Pack (w1, b1, w2, b2, w3, b3) into one lane-padded f32 buffer.

    The last layer is pre-split into mean / log_std halves so the kernel never
    slices at a non-zero lane offset, and all four bias rows are packed into a
    single 8-row (sublane-aligned) block.  Returns (packed, meta).
    """
    w1, b1, w2, b2, w3, b3 = params
    d_in, h1 = w1.shape
    h1_, h2 = w2.shape
    h2_, d_out = w3.shape
    assert h1 == h1_ and h2 == h2_ and d_out % 2 == 0
    a_dim = d_out // 2

    r1 = _round_up(d_in, 8)
    lw = _round_up(max(h1, h2, a_dim), 8)

    def pad2(m, rows, cols):
        m = jnp.asarray(m, jnp.float32)
        return jnp.pad(m, ((0, rows - m.shape[0]), (0, cols - m.shape[1])))

    w3m, w3s = w3[:, :a_dim], w3[:, a_dim:]
    b3m, b3s = b3[:, :a_dim], b3[:, a_dim:]

    bias_block = jnp.concatenate([
        pad2(b1, 1, lw), pad2(b2, 1, lw), pad2(b3m, 1, lw), pad2(b3s, 1, lw),
        jnp.zeros((4, lw), jnp.float32),
    ], axis=0)                                # (8, lw), sublane-aligned

    packed = jnp.concatenate([
        pad2(w1, r1, lw),
        pad2(w2, lw, lw),
        pad2(w3m, lw, lw),
        pad2(w3s, lw, lw),
        bias_block,
    ], axis=0)

    meta = dict(r1=r1, lw=lw, a_dim=a_dim, d_in=d_in)
    return packed, meta


def policy_forward(states, packed_params, meta, noise, *,
                   max_batch_tile=8192, min_parallel_batch=256):
    """states: (B, d_in); noise: (B, a_dim) standard-normal epsilon.

    Returns (actions, entropies, tanh(mean)), all f32.
    """
    r1, lw, a_dim = meta["r1"], meta["lw"], meta["a_dim"]
    d_in = meta["d_in"]
    B = states.shape[0]
    assert states.shape == (B, d_in)
    assert noise.shape == (B, a_dim)

    # bf16 inputs are streamed as-is (halves the dominant states HBM read when
    # the caller already holds bf16 activations); otherwise stream f32.  The
    # kernel upcasts to f32 before any elementwise / transcendental math.
    def _stream(x):
        return x if x.dtype == jnp.bfloat16 else jnp.asarray(x, jnp.float32)

    states = _stream(states)
    noise = _stream(noise)

    # Pad the feature dim of states up to the (8-aligned) row count of w1.
    if d_in < r1:
        states = jnp.pad(states, ((0, 0), (0, r1 - d_in)))

    # Balanced batch tiling:
    #   * >= 2 grid steps once B is moderately large so the "parallel" batch
    #     axis actually uses both TensorCores on v7x;
    #   * tb = round_up(cdiv(B, n_steps), 16) minimizes zero-row padding at
    #     awkward batch sizes (multiple of 16 keeps bf16 sublane tiling legal);
    #   * cap 8192: (8192, 16) f32 tile ~0.5 MiB, so double-buffered inputs +
    #     outputs stay ~2 MiB -- far under scoped-VMEM on v5e/v6e/v7x while
    #     amortizing the ~0.35 us per-grid-step overhead.
    cap = max(_round_up(max_batch_tile, 16), 16)
    n_steps = _cdiv(max(B, 1), cap)
    if B >= min_parallel_batch:
        n_steps = max(n_steps, 2)
    tb = min(_round_up(_cdiv(max(B, 1), n_steps), 16), cap)
    bp = _round_up(max(B, 1), tb)
    if bp != B:
        states = jnp.pad(states, ((0, bp - B), (0, 0)))
        noise = jnp.pad(noise, ((0, bp - B), (0, 0)))

    out_w = 2 * a_dim + 1
    kernel = functools.partial(_policy_kernel, r1=r1, lw=lw, a_dim=a_dim)
    prow, pcol = packed_params.shape

    merged = pl.pallas_call(
        kernel,
        grid=(bp // tb,),
        in_specs=[
            pl.BlockSpec((tb, r1), lambda i: (i, 0)),       # states tile
            pl.BlockSpec((tb, a_dim), lambda i: (i, 0)),    # noise tile
            pl.BlockSpec((prow, pcol), lambda i: (0, 0)),   # packed params (resident)
        ],
        out_specs=pl.BlockSpec((tb, out_w), lambda i: (i, 0)),
        out_shape=jax.ShapeDtypeStruct((bp, out_w), jnp.float32),
        compiler_params=pltpu.CompilerParams(
            dimension_semantics=("parallel",)),
    )(states, noise, packed_params)

    actions = merged[:B, 0:a_dim]
    tanh_mean = merged[:B, a_dim:2 * a_dim]
    entropies = merged[:B, 2 * a_dim:2 * a_dim + 1]
    return actions, entropies, tanh_mean


def policy_reference(states, params, noise):
    """Pure-JAX reference of the PyTorch forward (for a sanity check)."""
    w1, b1, w2, b2, w3, b3 = params
    hp = jax.lax.Precision.HIGHEST
    h = jax.nn.relu(jnp.dot(states, w1, precision=hp) + b1)
    h = jax.nn.relu(jnp.dot(h, w2, precision=hp) + b2)
    out = jnp.dot(h, w3, precision=hp) + b3
    a_dim = out.shape[-1] // 2
    mean, log_std = out[:, :a_dim], out[:, a_dim:]
    log_std = jnp.clip(log_std, LOG_STD_MIN, LOG_STD_MAX)
    std = jnp.exp(log_std)
    x_actions = mean + std * noise
    actions = jnp.tanh(x_actions)
    log_prob = -0.5 * noise * noise - log_std - _HALF_LOG_2PI
    log_probs = log_prob - jnp.log(1.0 - actions * actions + EPS)
    entropies = -jnp.sum(log_probs, axis=1, keepdims=True)
    return actions, entropies, jnp.tanh(mean)


def init_params(key, input_dim, hidden_units, output_dim):
    """PyTorch nn.Linear-style init: U(-1/sqrt(fan_in), 1/sqrt(fan_in))."""
    dims = [input_dim] + list(hidden_units) + [output_dim]
    params = []
    for i in range(len(dims) - 1):
        key, kw, kb = jax.random.split(key, 3)
        bound = 1.0 / math.sqrt(dims[i])
        w = jax.random.uniform(kw, (dims[i], dims[i + 1]), jnp.float32,
                               minval=-bound, maxval=bound)
        b = jax.random.uniform(kb, (1, dims[i + 1]), jnp.float32,
                               minval=-bound, maxval=bound)
        params += [w, b]
    return tuple(params)


def _check(states, params, packed, meta, noise, tol=5e-2):
    actions, entropies, tanh_mean = jax.block_until_ready(
        policy_forward(states, packed, meta, noise))
    B = states.shape[0]
    a_dim = meta["a_dim"]
    assert actions.shape == (B, a_dim)
    assert entropies.shape == (B, 1)
    assert tanh_mean.shape == (B, a_dim)
    assert bool(jnp.all(jnp.isfinite(actions)))
    assert bool(jnp.all(jnp.isfinite(entropies)))
    assert bool(jnp.all(jnp.isfinite(tanh_mean)))
    ref_a, ref_e, ref_tm = policy_reference(states, params, noise)
    assert float(jnp.max(jnp.abs(actions - ref_a))) < tol
    assert float(jnp.max(jnp.abs(entropies - ref_e))) < tol
    assert float(jnp.max(jnp.abs(tanh_mean - ref_tm))) < tol


if __name__ == "__main__":
    # cfg: policy_input_dim=16, policy_hidden_units=[32, 32], policy_output_dim=8
    # (=> 4-dim action space: 4 means + 4 log-stds)
    B, D_IN, H1, H2, D_OUT = 8, 16, 32, 32, 8
    A = D_OUT // 2

    key = jax.random.PRNGKey(0)
    k_params, k_states, k_noise, k_states2, k_noise2 = jax.random.split(key, 5)

    params = init_params(k_params, D_IN, [H1, H2], D_OUT)
    packed, meta = pack_params(params)

    # Small-batch check (single grid step).
    states = jax.random.normal(k_states, (B, D_IN), jnp.float32)
    noise = jax.random.normal(k_noise, (B, A), jnp.float32)   # rsample() epsilon
    _check(states, params, packed, meta, noise)

    # Larger, awkward batch (exercises balanced multi-step grid + padding).
    B2 = 600
    states2 = jax.random.normal(k_states2, (B2, D_IN), jnp.float32)
    noise2 = jax.random.normal(k_noise2, (B2, A), jnp.float32)
    _check(states2, params, packed, meta, noise2)

    print("KERNEL_OK")
</pallas_src>

<mosaic_0001>
module attributes {stable_mosaic.version = 11 : i64} {
  func.func @_policy_kernel(%arg0: i32, %arg1: memref<16x16xf32, #tpu.memory_space<vmem>>, %arg2: memref<16x4xf32, #tpu.memory_space<vmem>>, %arg3: memref<120x32xf32, #tpu.memory_space<vmem>>, %arg4: memref<16x9xf32, #tpu.memory_space<vmem>>) attributes {dimension_semantics = [#tpu.dimension_semantics<parallel>], iteration_bounds = array<i64: 1>, scalar_prefetch = 0 : i64, scratch_operands = 0 : i64, tpu.core_type = #tpu.core_type<tc>, window_params = [{transform_indices = @transform_0, window_bounds = array<i64: 16, 16>}, {transform_indices = @transform_1, window_bounds = array<i64: 16, 4>}, {pipeline_mode = #tpu.pipeline_mode<synchronous>, transform_indices = @transform_2, window_bounds = array<i64: 120, 32>}, {transform_indices = @transform_3, window_bounds = array<i64: 16, 9>}]} {
    %c0 = arith.constant 0 : index
    %c0_0 = arith.constant 0 : index
    %0 = vector.load %arg1[%c0, %c0_0] : memref<16x16xf32, #tpu.memory_space<vmem>>, vector<16x16xf32>
    %c0_1 = arith.constant 0 : index
    %c0_2 = arith.constant 0 : index
    %1 = vector.load %arg2[%c0_1, %c0_2] : memref<16x4xf32, #tpu.memory_space<vmem>>, vector<16x4xf32>
    %c0_3 = arith.constant 0 : index
    %c0_4 = arith.constant 0 : index
    %2 = vector.load %arg3[%c0_3, %c0_4] : memref<120x32xf32, #tpu.memory_space<vmem>>, vector<16x32xf32>
    %c16 = arith.constant 16 : index
    %c0_5 = arith.constant 0 : index
    %3 = vector.load %arg3[%c16, %c0_5] : memref<120x32xf32, #tpu.memory_space<vmem>>, vector<32x32xf32>
    %c48 = arith.constant 48 : index
    %c0_6 = arith.constant 0 : index
    %4 = vector.load %arg3[%c48, %c0_6] : memref<120x32xf32, #tpu.memory_space<vmem>>, vector<32x32xf32>
    %c80 = arith.constant 80 : index
    %c0_7 = arith.constant 0 : index
    %5 = vector.load %arg3[%c80, %c0_7] : memref<120x32xf32, #tpu.memory_space<vmem>>, vector<32x32xf32>
    %c112 = arith.constant 112 : index
    %c0_8 = arith.constant 0 : index
    %6 = vector.load %arg3[%c112, %c0_8] : memref<120x32xf32, #tpu.memory_space<vmem>>, vector<8x32xf32>
    %7 = vector.extract_strided_slice %6 {offsets = [0, 0], sizes = [1, 32], strides = [1, 1]} : vector<8x32xf32> to vector<1x32xf32>
    %8 = vector.extract_strided_slice %6 {offsets = [1, 0], sizes = [1, 32], strides = [1, 1]} : vector<8x32xf32> to vector<1x32xf32>
    %9 = vector.extract_strided_slice %6 {offsets = [2, 0], sizes = [1, 32], strides = [1, 1]} : vector<8x32xf32> to vector<1x32xf32>
    %10 = vector.extract_strided_slice %6 {offsets = [3, 0], sizes = [1, 32], strides = [1, 1]} : vector<8x32xf32> to vector<1x32xf32>
    %cst = arith.constant dense<0.000000e+00> : vector<16x32xf32>
    %11 = tpu.matmul %0, %2, %cst {dimension_numbers = #tpu.dot_dimension_numbers<[1], [0], [0], [1], [0, 0, 1, 1], [], []>} : vector<16x16xf32>, vector<16x32xf32>, vector<16x32xf32> -> vector<16x32xf32>
    %12 = vector.broadcast %7 : vector<1x32xf32> to vector<16x32xf32>
    %13 = arith.addf %11, %12 : vector<16x32xf32>
    %cst_9 = arith.constant 0.000000e+00 : f32
    %14 = vector.broadcast %cst_9 : f32 to vector<16x32xf32>
    %15 = arith.maximumf %13, %14 : vector<16x32xf32>
    %cst_10 = arith.constant dense<0.000000e+00> : vector<16x32xf32>
    %16 = tpu.matmul %15, %3, %cst_10 {dimension_numbers = #tpu.dot_dimension_numbers<[1], [0], [0], [1], [0, 0, 1, 1], [], []>} : vector<16x32xf32>, vector<32x32xf32>, vector<16x32xf32> -> vector<16x32xf32>
    %17 = vector.broadcast %8 : vector<1x32xf32> to vector<16x32xf32>
    %18 = arith.addf %16, %17 : vector<16x32xf32>
    %cst_11 = arith.constant 0.000000e+00 : f32
    %19 = vector.broadcast %cst_11 : f32 to vector<16x32xf32>
    %20 = arith.maximumf %18, %19 : vector<16x32xf32>
    %cst_12 = arith.constant dense<0.000000e+00> : vector<16x32xf32>
    %21 = tpu.matmul %20, %4, %cst_12 {dimension_numbers = #tpu.dot_dimension_numbers<[1], [0], [0], [1], [0, 0, 1, 1], [], []>} : vector<16x32xf32>, vector<32x32xf32>, vector<16x32xf32> -> vector<16x32xf32>
    %22 = vector.broadcast %9 : vector<1x32xf32> to vector<16x32xf32>
    %23 = arith.addf %21, %22 : vector<16x32xf32>
    %24 = vector.extract_strided_slice %23 {offsets = [0, 0], sizes = [16, 4], strides = [1, 1]} : vector<16x32xf32> to vector<16x4xf32>
    %cst_13 = arith.constant dense<0.000000e+00> : vector<16x32xf32>
    %25 = tpu.matmul %20, %5, %cst_13 {dimension_numbers = #tpu.dot_dimension_numbers<[1], [0], [0], [1], [0, 0, 1, 1], [], []>} : vector<16x32xf32>, vector<32x32xf32>, vector<16x32xf32> -> vector<16x32xf32>
    %26 = vector.broadcast %10 : vector<1x32xf32> to vector<16x32xf32>
    %27 = arith.addf %25, %26 : vector<16x32xf32>
    %28 = vector.extract_strided_slice %27 {offsets = [0, 0], sizes = [16, 4], strides = [1, 1]} : vector<16x32xf32> to vector<16x4xf32>
    %cst_14 = arith.constant -2.000000e+01 : f32
    %cst_15 = arith.constant 2.000000e+00 : f32
    %29 = vector.broadcast %cst_14 : f32 to vector<16x4xf32>
    %30 = arith.maximumf %29, %28 : vector<16x4xf32>
    %31 = vector.broadcast %cst_15 : f32 to vector<16x4xf32>
    %32 = arith.minimumf %31, %30 : vector<16x4xf32>
    %33 = math.exp %32 : vector<16x4xf32>
    %34 = arith.mulf %33, %1 : vector<16x4xf32>
    %35 = arith.addf %24, %34 : vector<16x4xf32>
    %36 = math.tanh %35 : vector<16x4xf32>
    %cst_16 = arith.constant -5.000000e-01 : f32
    %37 = vector.broadcast %cst_16 : f32 to vector<16x4xf32>
    %38 = arith.mulf %37, %1 : vector<16x4xf32>
    %39 = arith.mulf %38, %1 : vector<16x4xf32>
    %40 = arith.subf %39, %32 : vector<16x4xf32>
    %cst_17 = arith.constant 0.918938517 : f32
    %41 = vector.broadcast %cst_17 : f32 to vector<16x4xf32>
    %42 = arith.subf %40, %41 : vector<16x4xf32>
    %43 = arith.mulf %36, %36 : vector<16x4xf32>
    %cst_18 = arith.constant 1.000000e+00 : f32
    %44 = vector.broadcast %cst_18 : f32 to vector<16x4xf32>
    %45 = arith.subf %44, %43 : vector<16x4xf32>
    %cst_19 = arith.constant 9.99999997E-7 : f32
    %46 = vector.broadcast %cst_19 : f32 to vector<16x4xf32>
    %47 = arith.addf %45, %46 : vector<16x4xf32>
    %48 = math.log %47 : vector<16x4xf32>
    %49 = arith.subf %42, %48 : vector<16x4xf32>
    %cst_20 = arith.constant dense<0.000000e+00> : vector<16xf32>
    %50 = vector.multi_reduction <add>, %49, %cst_20 [1] : vector<16x4xf32> to vector<16xf32>
    %51 = vector.shape_cast %50 : vector<16xf32> to vector<16x1xf32>
    %cst_21 = arith.constant 0.000000e+00 : f32
    %52 = vector.broadcast %cst_21 : f32 to vector<16x1xf32>
    %53 = arith.subf %52, %51 : vector<16x1xf32>
    %c0_22 = arith.constant 0 : index
    %c0_23 = arith.constant 0 : index
    %54 = vector.load %arg4[%c0_22, %c0_23] : memref<16x9xf32, #tpu.memory_space<vmem>>, vector<16x4xf32>
    tpu.vector_store %arg4[%c0_22, %c0_23], %36 {strides = array<i32>} : memref<16x9xf32, #tpu.memory_space<vmem>>, vector<16x4xf32>,
    %55 = math.tanh %24 : vector<16x4xf32>
    %c0_24 = arith.constant 0 : index
    %c4 = arith.constant 4 : index
    %56 = vector.load %arg4[%c0_24, %c4] : memref<16x9xf32, #tpu.memory_space<vmem>>, vector<16x4xf32>
    tpu.vector_store %arg4[%c0_24, %c4], %55 {strides = array<i32>} : memref<16x9xf32, #tpu.memory_space<vmem>>, vector<16x4xf32>,
    %c0_25 = arith.constant 0 : index
    %c8 = arith.constant 8 : index
    %57 = vector.load %arg4[%c0_25, %c8] : memref<16x9xf32, #tpu.memory_space<vmem>>, vector<16x1xf32>
    tpu.vector_store %arg4[%c0_25, %c8], %53 {strides = array<i32>} : memref<16x9xf32, #tpu.memory_space<vmem>>, vector<16x1xf32>,
    return
  }
  func.func @transform_0(%arg0: i32) -> (i32, i32) {
    %c0_i32 = arith.constant 0 : i32
    %c0_i32_0 = arith.constant 0 : i32
    return %arg0, %c0_i32 : i32, i32
  }
  func.func @transform_1(%arg0: i32) -> (i32, i32) {
    %c0_i32 = arith.constant 0 : i32
    %c0_i32_0 = arith.constant 0 : i32
    return %arg0, %c0_i32 : i32, i32
  }
  func.func @transform_2(%arg0: i32) -> (i32, i32) {
    %c0_i32 = arith.constant 0 : i32
    %c0_i32_0 = arith.constant 0 : i32
    %c0_i32_1 = arith.constant 0 : i32
    return %c0_i32, %c0_i32_0 : i32, i32
  }
  func.func @transform_3(%arg0: i32) -> (i32, i32) {
    %c0_i32 = arith.constant 0 : i32
    %c0_i32_0 = arith.constant 0 : i32
    return %arg0, %c0_i32 : i32, i32
  }
}

</mosaic_0001>

<llo_original>
// kernel: tpu_custom_call.1
$region0: #{tpu_custom_call.1}
  #allocation0 [shape = 'u32[]', space=smem, size = 0x4, offset = 0x4, fixed_abs, tag = 'smem constant byte address 0x4 - core index']
  #allocation1 [shape = 'u32[144,128]{1,0:T(1,128)}', space=vmem, size = 0x12000, scoped, tag = 'internal scratch']
  %s0 = inlined_call_operand.vmem [shape: f32[16,16], index: 0, kind: input, shape index: {}]
  %s1 = inlined_call_operand.vmem [shape: f32[16,4], index: 1, kind: input, shape index: {}]
  %s2 = inlined_call_operand.vmem [shape: f32[120,32], index: 2, kind: input, shape index: {}]
  %s3 = inlined_call_operand.hbm [shape: f32[16,9], index: 3, kind: output, shape index: {}]
  %s4 = sld [smem:[#allocation0]]
  $region22: #{tpu_custom_call.1} parent=0
    _
  %s6 = ssub.s32 1, %s4
  %s7 = scalar_select 0, %s6, %s4
  $region1: #{tpu_custom_call.1} parent=0
    #allocation2 [shape = 'u8[8192]{0}', space=vmem, size = 0x2000, scoped, tag = 'output window, operand 0, single buffered']
    #allocation3 [shape = 's32[1]{0}', space=sflag, size = 0x4, scoped, tag = 'scoped memory for tpu_custom_call.1']
    %8 = vsyncpa [#allocation3], 0
    // Predicated region
    $region2: #{tpu_custom_call.1} parent=1 // pred_check
      _
    $region3: #{tpu_custom_call.1} parent=1 // pred_check_branch
      %10 = sbr.rel (0) target = $region5
    $region4: #{tpu_custom_call.1} parent=1 // pred_region
      _
    $region5: #{tpu_custom_call.1} parent=1 // pred_fallthru
      _
    // Predicated region
    $region6: #{tpu_custom_call.1} parent=1 // pred_check
      _
    $region7: #{tpu_custom_call.1} parent=1 // pred_check_branch
      %12 = sbr.rel (0) target = $region9
    $region8: #{tpu_custom_call.1} parent=1 // pred_region
      _
    $region9: #{tpu_custom_call.1} parent=1 // pred_fallthru
      _
    // Predicated region
    $region10: #{tpu_custom_call.1} parent=1 // pred_check
      _
    $region11: #{tpu_custom_call.1} parent=1 // pred_check_branch
      %14 = sbr.rel (0) target = $region13
    $region12: #{tpu_custom_call.1} parent=1 // pred_region
      _
    $region13: #{tpu_custom_call.1} parent=1 // pred_fallthru
      _
    %v15 = vld [vmem:[%s0] sm:$0xff]
    %v16 = vld [vmem:[%s0 + $0x8] sm:$0xff]
    %v17 = vld [vmem:[%s1] sm:$0xff]
    %v18 = vld [vmem:[%s1 + $0x8] sm:$0xff]
    %v19 = vld [vmem:[%s2] sm:$0xff]
    %v20 = vld [vmem:[%s2 + $0x8] sm:$0xff]
    %v21 = vld [vmem:[%s2 + $0x10] sm:$0xff]
    %v22 = vld [vmem:[%s2 + $0x18] sm:$0xff]
    %v23 = vld [vmem:[%s2 + $0x20] sm:$0xff]
    %v24 = vld [vmem:[%s2 + $0x28] sm:$0xff]
    %v25 = vld [vmem:[%s2 + $0x30] sm:$0xff]
    %v26 = vld [vmem:[%s2 + $0x38] sm:$0xff]
    %v27 = vld [vmem:[%s2 + $0x40] sm:$0xff]
    %v28 = vld [vmem:[%s2 + $0x48] sm:$0xff]
    %v29 = vld [vmem:[%s2 + $0x50] sm:$0xff]
    %v30 = vld [vmem:[%s2 + $0x58] sm:$0xff]
    %v31 = vld [vmem:[%s2 + $0x60] sm:$0xff]
    %v32 = vld [vmem:[%s2 + $0x68] sm:$0xff]
    %v33 = vld [vmem:[%s2 + $0x70] sm:$0xff]
    %v34 = vlaneseq
    %v35 = vshrl.u32 %v34, 7
    %v36 = vsub.s32 0, %v35
    %v37 = vrot.slane %v33, %v36
    %vm38 = vcmask 130048
    %v40 = vsel %vm38, %v15, 0
    %v43 = vsel %vm38, %v16, 0
    %45 = vmatprep.subr.mxu0 0.0
    %46 = vmatpush1.msra.mxu0 0.0
    %47 = vmatprep.subr.mxu0 0.0
    %48 = vmatpush1.msra.mxu0 0.0
    %49 = vmatprep.subr.mxu0 0.0
    %50 = vmatpush1.msra.mxu0 0.0
    %51 = vmatprep.subr.mxu0 0.0
    %52 = vmatpush1.msra.mxu0 0.0
    %53 = vmatprep.subr.mxu0 0.0
    %54 = vmatpush1.msra.mxu0 0.0
    %55 = vmatprep.subr.mxu0 0.0
    %56 = vmatpush1.msra.mxu0 0.0
    %57 = vmatprep.subr.mxu0 0.0
    %58 = vmatpush1.msra.mxu0 0.0
    %59 = vmatprep.subr.mxu0 0.0
    %60 = vmatpush1.msra.mxu0 0.0
    %61 = vmatprep.subr.mxu0 0.0
    %62 = vmatpush1.msra.mxu0 0.0
    %63 = vmatprep.subr.mxu0 0.0
    %64 = vmatpush1.msra.mxu0 0.0
    %65 = vmatprep.subr.mxu0 0.0
    %66 = vmatpush1.msra.mxu0 0.0
    %67 = vmatprep.subr.mxu0 0.0
    %68 = vmatpush1.msra.mxu0 0.0
    %69 = vmatprep.subr.mxu0 0.0
    %70 = vmatpush1.msra.mxu0 0.0
    %71 = vmatprep.subr.mxu0 0.0
    %72 = vmatpush1.msra.mxu0 0.0
    %73 = vmatprep.subr.mxu0 0.0
    %74 = vmatpush1.msra.mxu0 %v20
    %75 = vmatprep.subr.mxu0 0.0
    %76 = vmatpush1.msra.mxu0 %v19
    %77 = vmatprep.subr.mxu0 0.0
    %78 = vmatpush2.msra.mxu0 0.0
    %79 = vmatprep.subr.mxu0 0.0
    %80 = vmatpush2.msra.mxu0 0.0
    %81 = vmatprep.subr.mxu0 0.0
    %82 = vmatpush2.msra.mxu0 0.0
    %83 = vmatprep.subr.mxu0 0.0
    %84 = vmatpush2.msra.mxu0 0.0
    %85 = vmatprep.subr.mxu0 0.0
    %86 = vmatpush2.msra.mxu0 0.0
    %87 = vmatprep.subr.mxu0 0.0
    %88 = vmatpush2.msra.mxu0 0.0
    %89 = vmatprep.subr.mxu0 0.0
    %90 = vmatpush2.msra.mxu0 0.0
    %91 = vmatprep.subr.mxu0 0.0
    %92 = vmatpush2.msra.mxu0 0.0
    %93 = vmatprep.subr.mxu0 0.0
    %94 = vmatpush2.msra.mxu0 0.0
    %95 = vmatprep.subr.mxu0 0.0
    %96 = vmatpush2.msra.mxu0 0.0
    %97 = vmatprep.subr.mxu0 0.0
    %98 = vmatpush2.msra.mxu0 0.0
    %99 = vmatprep.subr.mxu0 0.0
    %100 = vmatpush2.msra.mxu0 0.0
    %101 = vmatprep.subr.mxu0 0.0
    %102 = vmatpush2.msra.mxu0 0.0
    %103 = vmatprep.subr.mxu0 0.0
    %104 = vmatpush2.msra.mxu0 0.0
    %105 = vmatprep.subr.mxu0 0.0
    %106 = vmatpush2.msra.mxu0 0.0
    %107 = vmatprep.subr.mxu0 0.0
    %108 = vmatpush2.msra.mxu0 0.0
    %109 = vmatprep.mubr.f32.mxu0 0.0
    %110 = vmatmul.mubr.f32.gmra.mxu0 %v40
    %v111 = vpop.f32.mrf.mxu0
    %v112 = vadd.f32 %v37, %v111
    %v113 = vpop.f32.mrf.mxu0
    %114 = vmatprep.mubr.f32.mxu0 0.0
    %115 = vmatmul.mubr.f32.gmra.mxu0 %v43
    %v116 = vpop.f32.mrf.mxu0
    %v117 = vadd.f32 %v37, %v116
    %v118 = vpop.f32.mrf.mxu0
    %119 = vdwg.mxu0
    %v120 = vmax.f32 %v112, 0.0
    %v121 = vmax.f32 %v117, 0.0
    %v122 = vlaneseq
    %v123 = vshrl.u32 %v122, 7
    %v124 = vsub.s32 1, %v123
    %v125 = vrot.slane %v33, %v124
    %vm126 = vcmask 261120
    %v128 = vsel %vm126, %v120, 0
    %v131 = vsel %vm126, %v121, 0
    %133 = vmatprep.subr.mxu0 0.0
    %134 = vmatpush1.msra.mxu0 0.0
    %135 = vmatprep.subr.mxu0 0.0
    %136 = vmatpush1.msra.mxu0 0.0
    %137 = vmatprep.subr.mxu0 0.0
    %138 = vmatpush1.msra.mxu0 0.0
    %139 = vmatprep.subr.mxu0 0.0
    %140 = vmatpush1.msra.mxu0 0.0
    %141 = vmatprep.subr.mxu0 0.0
    %142 = vmatpush1.msra.mxu0 0.0
    %143 = vmatprep.subr.mxu0 0.0
    %144 = vmatpush1.msra.mxu0 0.0
    %145 = vmatprep.subr.mxu0 0.0
    %146 = vmatpush1.msra.mxu0 0.0
    %147 = vmatprep.subr.mxu0 0.0
    %148 = vmatpush1.msra.mxu0 0.0
    %149 = vmatprep.subr.mxu0 0.0
    %150 = vmatpush1.msra.mxu0 0.0
    %151 = vmatprep.subr.mxu0 0.0
    %152 = vmatpush1.msra.mxu0 0.0
    %153 = vmatprep.subr.mxu0 0.0
    %154 = vmatpush1.msra.mxu0 0.0
    %155 = vmatprep.subr.mxu0 0.0
    %156 = vmatpush1.msra.mxu0 0.0
    %157 = vmatprep.subr.mxu0 0.0
    %158 = vmatpush1.msra.mxu0 %v24
    %159 = vmatprep.subr.mxu0 0.0
    %160 = vmatpush1.msra.mxu0 %v23
    %161 = vmatprep.subr.mxu0 0.0
    %162 = vmatpush1.msra.mxu0 %v22
    %163 = vmatprep.subr.mxu0 0.0
    %164 = vmatpush1.msra.mxu0 %v21
    %165 = vmatprep.subr.mxu0 0.0
    %166 = vmatpush2.msra.mxu0 0.0
    %167 = vmatprep.subr.mxu0 0.0
    %168 = vmatpush2.msra.mxu0 0.0
    %169 = vmatprep.subr.mxu0 0.0
    %170 = vmatpush2.msra.mxu0 0.0
    %171 = vmatprep.subr.mxu0 0.0
    %172 = vmatpush2.msra.mxu0 0.0
    %173 = vmatprep.subr.mxu0 0.0
    %174 = vmatpush2.msra.mxu0 0.0
    %175 = vmatprep.subr.mxu0 0.0
    %176 = vmatpush2.msra.mxu0 0.0
    %177 = vmatprep.subr.mxu0 0.0
    %178 = vmatpush2.msra.mxu0 0.0
    %179 = vmatprep.subr.mxu0 0.0
    %180 = vmatpush2.msra.mxu0 0.0
    %181 = vmatprep.subr.mxu0 0.0
    %182 = vmatpush2.msra.mxu0 0.0
    %183 = vmatprep.subr.mxu0 0.0
    %184 = vmatpush2.msra.mxu0 0.0
    %185 = vmatprep.subr.mxu0 0.0
    %186 = vmatpush2.msra.mxu0 0.0
    %187 = vmatprep.subr.mxu0 0.0
    %188 = vmatpush2.msra.mxu0 0.0
    %189 = vmatprep.subr.mxu0 0.0
    %190 = vmatpush2.msra.mxu0 0.0
    %191 = vmatprep.subr.mxu0 0.0
    %192 = vmatpush2.msra.mxu0 0.0
    %193 = vmatprep.subr.mxu0 0.0
    %194 = vmatpush2.msra.mxu0 0.0
    %195 = vmatprep.subr.mxu0 0.0
    %196 = vmatpush2.msra.mxu0 0.0
    %197 = vmatprep.mubr.f32.mxu0 0.0
    %198 = vmatmul.mubr.f32.gmra.mxu0 %v128
    %v199 = vpop.f32.mrf.mxu0
    %v200 = vadd.f32 %v125, %v199
    %v201 = vpop.f32.mrf.mxu0
    %202 = vmatprep.mubr.f32.mxu0 0.0
    %203 = vmatmul.mubr.f32.gmra.mxu0 %v131
    %v204 = vpop.f32.mrf.mxu0
    %v205 = vadd.f32 %v125, %v204
    %v206 = vpop.f32.mrf.mxu0
    %207 = vdwg.mxu0
    %v208 = vmax.f32 %v200, 0.0
    %v209 = vmax.f32 %v205, 0.0
    %v210 = vlaneseq
    %v211 = vshrl.u32 %v210, 7
    %v212 = vsub.s32 2, %v211
    %v213 = vrot.slane %v33, %v212
    %v215 = vsel %vm126, %v208, 0
    %v218 = vsel %vm126, %v209, 0
    %220 = vmatprep.subr.mxu0 0.0
    %221 = vmatpush1.msra.mxu0 0.0
    %222 = vmatprep.subr.mxu0 0.0
    %223 = vmatpush1.msra.mxu0 0.0
    %224 = vmatprep.subr.mxu0 0.0
    %225 = vmatpush1.msra.mxu0 0.0
    %226 = vmatprep.subr.mxu0 0.0
    %227 = vmatpush1.msra.mxu0 0.0
    %228 = vmatprep.subr.mxu0 0.0
    %229 = vmatpush1.msra.mxu0 0.0
    %230 = vmatprep.subr.mxu0 0.0
    %231 = vmatpush1.msra.mxu0 0.0
    %232 = vmatprep.subr.mxu0 0.0
    %233 = vmatpush1.msra.mxu0 0.0
    %234 = vmatprep.subr.mxu0 0.0
    %235 = vmatpush1.msra.mxu0 0.0
    %236 = vmatprep.subr.mxu0 0.0
    %237 = vmatpush1.msra.mxu0 0.0
    %238 = vmatprep.subr.mxu0 0.0
    %239 = vmatpush1.msra.mxu0 0.0
    %240 = vmatprep.subr.mxu0 0.0
    %241 = vmatpush1.msra.mxu0 0.0
    %242 = vmatprep.subr.mxu0 0.0
    %243 = vmatpush1.msra.mxu0 0.0
    %244 = vmatprep.subr.mxu0 0.0
    %245 = vmatpush1.msra.mxu0 %v28
    %246 = vmatprep.subr.mxu0 0.0
    %247 = vmatpush1.msra.mxu0 %v27
    %248 = vmatprep.subr.mxu0 0.0
    %249 = vmatpush1.msra.mxu0 %v26
    %250 = vmatprep.subr.mxu0 0.0
    %251 = vmatpush1.msra.mxu0 %v25
    %252 = vmatprep.subr.mxu0 0.0
    %253 = vmatpush2.msra.mxu0 0.0
    %254 = vmatprep.subr.mxu0 0.0
    %255 = vmatpush2.msra.mxu0 0.0
    %256 = vmatprep.subr.mxu0 0.0
    %257 = vmatpush2.msra.mxu0 0.0
    %258 = vmatprep.subr.mxu0 0.0
    %259 = vmatpush2.msra.mxu0 0.0
    %260 = vmatprep.subr.mxu0 0.0
    %261 = vmatpush2.msra.mxu0 0.0
    %262 = vmatprep.subr.mxu0 0.0
    %263 = vmatpush2.msra.mxu0 0.0
    %264 = vmatprep.subr.mxu0 0.0
    %265 = vmatpush2.msra.mxu0 0.0
    %266 = vmatprep.subr.mxu0 0.0
    %267 = vmatpush2.msra.mxu0 0.0
    %268 = vmatprep.subr.mxu0 0.0
    %269 = vmatpush2.msra.mxu0 0.0
    %270 = vmatprep.subr.mxu0 0.0
    %271 = vmatpush2.msra.mxu0 0.0
    %272 = vmatprep.subr.mxu0 0.0
    %273 = vmatpush2.msra.mxu0 0.0
    %274 = vmatprep.subr.mxu0 0.0
    %275 = vmatpush2.msra.mxu0 0.0
    %276 = vmatprep.subr.mxu0 0.0
    %277 = vmatpush2.msra.mxu0 0.0
    %278 = vmatprep.subr.mxu0 0.0
    %279 = vmatpush2.msra.mxu0 0.0
    %280 = vmatprep.subr.mxu0 0.0
    %281 = vmatpush2.msra.mxu0 0.0
    %282 = vmatprep.subr.mxu0 0.0
    %283 = vmatpush2.msra.mxu0 0.0
    %284 = vmatprep.mubr.f32.mxu0 0.0
    %285 = vmatmul.mubr.f32.gmra.mxu0 %v215
    %v286 = vpop.f32.mrf.mxu0
    %v287 = vadd.f32 %v213, %v286
    %v288 = vpop.f32.mrf.mxu0
    %289 = vmatprep.mubr.f32.mxu0 0.0
    %290 = vmatmul.mubr.f32.gmra.mxu0 %v218
    %v291 = vpop.f32.mrf.mxu0
    %v292 = vadd.f32 %v213, %v291
    %v293 = vpop.f32.mrf.mxu0
    %294 = vdwg.mxu0
    %v295 = vlaneseq
    %v296 = vshrl.u32 %v295, 7
    %v297 = vsub.s32 3, %v296
    %v298 = vrot.slane %v33, %v297
    %299 = vmatprep.subr.mxu0 0.0
    %300 = vmatpush1.msra.mxu0 0.0
    %301 = vmatprep.subr.mxu0 0.0
    %302 = vmatpush1.msra.mxu0 0.0
    %303 = vmatprep.subr.mxu0 0.0
    %304 = vmatpush1.msra.mxu0 0.0
    %305 = vmatprep.subr.mxu0 0.0
    %306 = vmatpush1.msra.mxu0 0.0
    %307 = vmatprep.subr.mxu0 0.0
    %308 = vmatpush1.msra.mxu0 0.0
    %309 = vmatprep.subr.mxu0 0.0
    %310 = vmatpush1.msra.mxu0 0.0
    %311 = vmatprep.subr.mxu0 0.0
    %312 = vmatpush1.msra.mxu0 0.0
    %313 = vmatprep.subr.mxu0 0.0
    %314 = vmatpush1.msra.mxu0 0.0
    %315 = vmatprep.subr.mxu0 0.0
    %316 = vmatpush1.msra.mxu0 0.0
    %317 = vmatprep.subr.mxu0 0.0
    %318 = vmatpush1.msra.mxu0 0.0
    %319 = vmatprep.subr.mxu0 0.0
    %320 = vmatpush1.msra.mxu0 0.0
    %321 = vmatprep.subr.mxu0 0.0
    %322 = vmatpush1.msra.mxu0 0.0
    %323 = vmatprep.subr.mxu0 0.0
    %324 = vmatpush1.msra.mxu0 %v32
    %325 = vmatprep.subr.mxu0 0.0
    %326 = vmatpush1.msra.mxu0 %v31
    %327 = vmatprep.subr.mxu0 0.0
    %328 = vmatpush1.msra.mxu0 %v30
    %329 = vmatprep.subr.mxu0 0.0
    %330 = vmatpush1.msra.mxu0 %v29
    %331 = vmatprep.subr.mxu0 0.0
    %332 = vmatpush2.msra.mxu0 0.0
    %333 = vmatprep.subr.mxu0 0.0
    %334 = vmatpush2.msra.mxu0 0.0
    %335 = vmatprep.subr.mxu0 0.0
    %336 = vmatpush2.msra.mxu0 0.0
    %337 = vmatprep.subr.mxu0 0.0
    %338 = vmatpush2.msra.mxu0 0.0
    %339 = vmatprep.subr.mxu0 0.0
    %340 = vmatpush2.msra.mxu0 0.0
    %341 = vmatprep.subr.mxu0 0.0
    %342 = vmatpush2.msra.mxu0 0.0
    %343 = vmatprep.subr.mxu0 0.0
    %344 = vmatpush2.msra.mxu0 0.0
    %345 = vmatprep.subr.mxu0 0.0
    %346 = vmatpush2.msra.mxu0 0.0
    %347 = vmatprep.subr.mxu0 0.0
    %348 = vmatpush2.msra.mxu0 0.0
    %349 = vmatprep.subr.mxu0 0.0
    %350 = vmatpush2.msra.mxu0 0.0
    %351 = vmatprep.subr.mxu0 0.0
    %352 = vmatpush2.msra.mxu0 0.0
    %353 = vmatprep.subr.mxu0 0.0
    %354 = vmatpush2.msra.mxu0 0.0
    %355 = vmatprep.subr.mxu0 0.0
    %356 = vmatpush2.msra.mxu0 0.0
    %357 = vmatprep.subr.mxu0 0.0
    %358 = vmatpush2.msra.mxu0 0.0
    %359 = vmatprep.subr.mxu0 0.0
    %360 = vmatpush2.msra.mxu0 0.0
    %361 = vmatprep.subr.mxu0 0.0
    %362 = vmatpush2.msra.mxu0 0.0
    %363 = vmatprep.mubr.f32.mxu0 0.0
    %364 = vmatmul.mubr.f32.gmra.mxu0 %v215
    %v365 = vpop.f32.mrf.mxu0
    %v366 = vadd.f32 %v298, %v365
    %v367 = vpop.f32.mrf.mxu0
    %368 = vmatprep.mubr.f32.mxu0 0.0
    %369 = vmatmul.mubr.f32.gmra.mxu0 %v218
    %v370 = vpop.f32.mrf.mxu0
    %v371 = vadd.f32 %v298, %v370
    %v372 = vpop.f32.mrf.mxu0
    %373 = vdwg.mxu0
    %v374 = vmax.f32 %v366, -20.0
    %v375 = vmax.f32 %v371, -20.0
    %v376 = vmin.f32 %v374, 2.0
    %v377 = vmin.f32 %v375, 2.0
    %v378 = vmul.f32 %v376, 1.442695
    %v379 = vpow.pop %v378
    %v380 = vmul.f32 %v377, 1.442695
    %v381 = vpow.pop %v380
    %v382 = vmul.f32 %v379, %v17
    %v383 = vmul.f32 %v381, %v18
    %v384 = vadd.f32 %v287, %v382
    %v385 = vadd.f32 %v292, %v383
    %v386 = vtanh.pop %v384
    %v387 = vtanh.pop %v385
    %v388 = vmul.f32 %v17, -0.5
    %v389 = vmul.f32 %v18, -0.5
    %v390 = vmul.f32 %v388, %v17
    %v391 = vmul.f32 %v389, %v18
    %v392 = vsub.f32 %v390, %v376
    %v393 = vsub.f32 %v391, %v377
    %v394 = vsub.f32 %v392, 0.9189385
    %v395 = vsub.f32 %v393, 0.9189385
    %v396 = vmul.f32 %v386, %v386
    %v397 = vmul.f32 %v387, %v387
    %v398 = vsub.f32 1.0, %v396
    %v399 = vsub.f32 1.0, %v397
    %v400 = vadd.f32 %v398, 1e-06
    %v401 = vadd.f32 %v399, 1e-06
    %v402 = vlog2.pop %v400
    %v403 = vmul.f32 %v402, 0.6931472
    %v404 = vlog2.pop %v401
    %v405 = vmul.f32 %v404, 0.6931472
    %v406 = vsub.f32 %v394, %v403
    %v407 = vsub.f32 %v395, %v405
    %vm408 = vcmask 31744
    %v409 = vsel %vm408, %v406, 0.0
    %410 = vadd.xlane.f32.xlu0 %v409
    %v411 = vpop.xlane.xlu0 %410
    %v412 = vsel %vm408, %v407, 0.0
    %413 = vadd.xlane.f32.xlu0 %v412
    %v414 = vpop.xlane.xlu0 %413
    %v415 = vsub.f32 0.0, %v411
    %v416 = vsub.f32 0.0, %v414
    %417 = vst.msk [vmem:[#allocation2] sm:$0xff] %vm408, %v386
    %418 = vst.msk [vmem:[#allocation2 + $0x8] sm:$0xff] %vm408, %v387
    %v419 = vtanh.pop %v287
    %v420 = vtanh.pop %v292
    %423 = vrot.lane.b32.xlu0 %v419, 4
    %v424 = vpop.permute.xlu0 %423
    %425 = vrot.lane.b32.xlu0 %v420, 4
    %v426 = vpop.permute.xlu0 %425
    %vm429 = vcmask 64544
    %430 = vst.msk [vmem:[#allocation2] sm:$0xff] %vm429, %v424
    %431 = vst.msk [vmem:[#allocation2 + $0x8] sm:$0xff] %vm429, %v426
    %vm432 = vcmask 72768
    %433 = vst.msk [vmem:[#allocation2] sm:$0xff] %vm432, %v415
    %434 = vst.msk [vmem:[#allocation2 + $0x8] sm:$0xff] %vm432, %v416
    // Predicated region
    $region14: #{tpu_custom_call.1} parent=1 // pred_check
      _
    $region15: #{tpu_custom_call.1} parent=1 // pred_check_branch
      %436 = sbr.rel (0) target = $region17
    $region16: #{tpu_custom_call.1} parent=1 // pred_region
      %s438 = ssub.s32 256, 256
      %439 = vsyncadd [#allocation3], %s438
      %s440 = sshll.u32 [#allocation2], 4
      %s441 = int_to_ptr.vmem [resolvable:$true] %s440
      %446 = dma.vmem_to_hbm [thread:$0]  %s441, 256, %s3, [#allocation3], 128, 128, 8
    $region17: #{tpu_custom_call.1} parent=1 // pred_fallthru
      _
    // Predicated region
    $region18: #{tpu_custom_call.1} parent=1 // pred_check
      _
    $region19: #{tpu_custom_call.1} parent=1 // pred_check_branch
      %448 = sbr.rel (0) target = $region21
    $region20: #{tpu_custom_call.1} parent=1 // pred_region
      %449 = dma.done [#allocation3], 256
    $region21: #{tpu_custom_call.1} parent=1 // pred_fallthru
      _
    %450 = vsyncpa [#allocation3], 1

</llo_original>
